<compile_context>
chip_gen: v5e
topology: v5e:2x2
jax: 0.10.0
libtpu: 0.0.40
codegen_flags: <defaults>
</compile_context>

<pallas_src>
import jax
import jax.numpy as jnp
from jax.experimental import pallas as pl
from jax.experimental.pallas import tpu as pltpu


# ---------------------------------------------------------------------------
# Kernel 1: dense projection  y = x @ w + b.
# Used for (1) the hoisted encoder input projection and (3) the hoisted final
# Linear -- both are single large MXU-friendly matmuls outside the recurrence.
# ---------------------------------------------------------------------------
def _proj_kernel(x_ref, w_ref, b_ref, o_ref):
    o_ref[...] = (jnp.dot(x_ref[...], w_ref[...],
                          preferred_element_type=jnp.float32)
                  + b_ref[...]).astype(o_ref.dtype)


def _proj(x2, w, b):
    """(M, K) @ (K, N) + (1, N) -> (M, N) in a single-block pallas_call."""
    M, K = x2.shape
    N = w.shape[1]
    return pl.pallas_call(
        _proj_kernel,
        out_shape=jax.ShapeDtypeStruct((M, N), jnp.float32),
        grid=(1,),
        in_specs=[pl.BlockSpec((M, K), lambda i: (0, 0)),
                  pl.BlockSpec((K, N), lambda i: (0, 0)),
                  pl.BlockSpec((1, N), lambda i: (0, 0))],
        out_specs=pl.BlockSpec((M, N), lambda i: (0, 0)),
    )(x2, w, b)


# ---------------------------------------------------------------------------
# Kernel 2: fused encoder-LSTM + decoder-LSTM recurrence over time.
# gx_ref holds the PRE-COMPUTED encoder gate pre-activations (x@Wih_e + b_e),
# so the serial chain per step is only:  h_e@Whh_e, enc@Wih_d, h_d@Whh_d.
# ---------------------------------------------------------------------------
def _recurrent_kernel(gx_ref, whh_e_ref, wih_d_ref, whh_d_ref, b_d_ref,
                      dec_ref, h_e, c_e, h_d, c_d):
    tile = pl.program_id(0)

    @pl.when(tile == 0)
    def _():
        h_e[...] = jnp.zeros_like(h_e)
        c_e[...] = jnp.zeros_like(c_e)
        h_d[...] = jnp.zeros_like(h_d)
        c_d[...] = jnp.zeros_like(c_d)

    B, H = h_e.shape
    t_tile = gx_ref.shape[0]

    # Loop-invariant loads / broadcasts hoisted out of the inner time loop
    # (JAX does not CSE broadcast_in_dim inside loops).
    whh_e = whh_e_ref[...]
    wih_d = wih_d_ref[...]
    whh_d = whh_d_ref[...]
    b_d = jnp.broadcast_to(b_d_ref[...], (B, 4 * H))

    # Full-vreg activation: sigmoid everywhere, tanh only on the cell-gate
    # lanes [2H, 3H), selected with a lane mask.
    lane = jax.lax.broadcasted_iota(jnp.int32, (B, 4 * H), 1)
    g_lanes = (lane >= 2 * H) & (lane < 3 * H)

    def lstm_cell(gates, c_prev):
        act = jnp.where(g_lanes, jnp.tanh(gates), jax.nn.sigmoid(gates))
        # PyTorch gate order: input, forget, cell(g), output.
        i = act[:, 0 * H:1 * H]
        f = act[:, 1 * H:2 * H]
        g = act[:, 2 * H:3 * H]
        o = act[:, 3 * H:4 * H]
        c_new = f * c_prev + i * g
        h_new = o * jnp.tanh(c_new)
        return h_new, c_new

    def step(t, carry):
        # Encoder step: input projection already precomputed (incl. bias).
        gates_e = gx_ref[t] + jnp.dot(h_e[...], whh_e,
                                      preferred_element_type=jnp.float32)
        enc_h, enc_c = lstm_cell(gates_e, c_e[...])
        h_e[...] = enc_h
        c_e[...] = enc_c

        # Decoder step: its input is the sequential encoder output, so its
        # input projection cannot be hoisted out of the loop.
        gates_d = (jnp.dot(enc_h, wih_d, preferred_element_type=jnp.float32)
                   + jnp.dot(h_d[...], whh_d,
                             preferred_element_type=jnp.float32)
                   + b_d)
        dec_h, dec_c = lstm_cell(gates_d, c_d[...])
        h_d[...] = dec_h
        c_d[...] = dec_c

        dec_ref[t] = dec_h          # final Linear is applied after the loop
        return carry

    jax.lax.fori_loop(0, t_tile, step, 0, unroll=True)


def ae_forward_pallas(x, params, *, t_tile=8):
    """x: (T, B, E) float32; returns (T, B, V) float32."""
    T, B, E = x.shape
    H = params["whh_e"].shape[0]          # weights stored transposed (in, out)
    V = params["wlin"].shape[1]
    t_tile = min(t_tile, T)
    assert T % t_tile == 0, "demo assumes T divisible by the time tile"

    # (1) Hoisted encoder input projection: one (T*B, E) @ (E, 4H) matmul,
    #     bias folded in.
    gx = _proj(x.reshape(T * B, E), params["wih_e"], params["b_e"])
    gx = gx.reshape(T, B, 4 * H)

    def wspec(shape):
        nd = len(shape)
        return pl.BlockSpec(shape, lambda i, _nd=nd: (0,) * _nd)

    grid_spec = pltpu.PrefetchScalarGridSpec(
        num_scalar_prefetch=0,
        grid=(T // t_tile,),
        in_specs=[
            pl.BlockSpec((t_tile, B, 4 * H), lambda i: (i, 0, 0)),   # gx
            wspec(params["whh_e"].shape),
            wspec(params["wih_d"].shape),
            wspec(params["whh_d"].shape),
            wspec(params["b_d"].shape),
        ],
        out_specs=pl.BlockSpec((t_tile, B, H), lambda i: (i, 0, 0)),  # dec h
        scratch_shapes=[
            pltpu.VMEM((B, H), jnp.float32),   # h_enc
            pltpu.VMEM((B, H), jnp.float32),   # c_enc
            pltpu.VMEM((B, H), jnp.float32),   # h_dec
            pltpu.VMEM((B, H), jnp.float32),   # c_dec
        ],
    )

    dec = pl.pallas_call(
        _recurrent_kernel,
        out_shape=jax.ShapeDtypeStruct((T, B, H), jnp.float32),
        grid_spec=grid_spec,
        compiler_params=pltpu.CompilerParams(
            # Recurrence over time -> must stay sequential ("arbitrary").
            dimension_semantics=("arbitrary",)),
    )(gx, params["whh_e"], params["wih_d"], params["whh_d"], params["b_d"])

    # (3) Hoisted final Linear: one (T*B, H) @ (H, V) matmul, single store.
    out = _proj(dec.reshape(T * B, H), params["wlin"], params["blin"])
    return out.reshape(T, B, V)


def init_params(key, embd_dims, hidden_dims, out_dims, nuc_vocab_size):
    """Deterministic synthetic params; PyTorch-style uniform(-1/sqrt(H), 1/sqrt(H)).

    Weights are stored already transposed (in_features, out_features).
    LSTM bias pairs (b_ih + b_hh) are pre-summed.
    """
    H = hidden_dims
    k = 1.0 / jnp.sqrt(H)
    ks = jax.random.split(key, 9)
    u = lambda kk, shape: jax.random.uniform(kk, shape, jnp.float32, -k, k)
    return {
        # encoder LSTM (input E -> hidden H)
        "wih_e": u(ks[0], (embd_dims, 4 * H)),
        "whh_e": u(ks[1], (H, 4 * H)),
        "b_e":   u(ks[2], (1, 4 * H)) + u(ks[3], (1, 4 * H)),
        # decoder LSTM (input out_dims == H -> hidden H)
        "wih_d": u(ks[4], (out_dims, 4 * H)),
        "whh_d": u(ks[5], (H, 4 * H)),
        "b_d":   u(ks[6], (1, 4 * H)) + u(ks[7], (1, 4 * H)),
        # Linear (H * nlayers -> vocab), nlayers == 1
        "wlin":  u(ks[8], (H, nuc_vocab_size)),
        "blin":  jnp.zeros((1, nuc_vocab_size), jnp.float32),
    }


def ae_forward_ref(x, params):
    """Pure-JAX reference (lax.scan over time) for correctness checking."""
    H = params["whh_e"].shape[0]
    B = x.shape[1]

    def lstm_scan(inputs, wih, whh, b):
        def step(carry, x_t):
            h, c = carry
            gates = x_t @ wih + h @ whh + b
            i = jax.nn.sigmoid(gates[:, 0 * H:1 * H])
            f = jax.nn.sigmoid(gates[:, 1 * H:2 * H])
            g = jnp.tanh(gates[:, 2 * H:3 * H])
            o = jax.nn.sigmoid(gates[:, 3 * H:4 * H])
            c = f * c + i * g
            h = o * jnp.tanh(c)
            return (h, c), h
        init = (jnp.zeros((B, H), jnp.float32), jnp.zeros((B, H), jnp.float32))
        _, outs = jax.lax.scan(step, init, inputs)
        return outs

    enc = lstm_scan(x, params["wih_e"], params["whh_e"], params["b_e"])
    dec = lstm_scan(enc, params["wih_d"], params["whh_d"], params["b_d"])
    return dec @ params["wlin"] + params["blin"]


if __name__ == "__main__":
    # Small shapes consistent with the module's forward:
    # nuc_vocab_size=8, embd_dims=16, hidden_dims=32, nlayers=1, out_dims=32
    T, B, E, H, V = 8, 8, 16, 32, 8

    key = jax.random.PRNGKey(0)
    kx, kp = jax.random.split(key)
    x = jax.random.normal(kx, (T, B, E), jnp.float32)
    params = init_params(kp, embd_dims=E, hidden_dims=H, out_dims=H,
                         nuc_vocab_size=V)

    out = jax.block_until_ready(ae_forward_pallas(x, params))
    ref = jax.block_until_ready(ae_forward_ref(x, params))

    assert out.shape == (T, B, V), out.shape
    assert jnp.allclose(out, ref, atol=1e-4, rtol=1e-4), \
        float(jnp.max(jnp.abs(out - ref)))
    print("KERNEL_OK")
</pallas_src>

<mosaic_0001>
module attributes {stable_mosaic.version = 11 : i64} {
  func.func @_proj_kernel(%arg0: i32, %arg1: memref<64x16xf32, #tpu.memory_space<vmem>>, %arg2: memref<16x128xf32, #tpu.memory_space<vmem>>, %arg3: memref<1x128xf32, #tpu.memory_space<vmem>>, %arg4: memref<64x128xf32, #tpu.memory_space<vmem>>) attributes {dimension_semantics = [#tpu.dimension_semantics<arbitrary>], iteration_bounds = array<i64: 1>, scalar_prefetch = 0 : i64, scratch_operands = 0 : i64, tpu.core_type = #tpu.core_type<tc>, window_params = [{pipeline_mode = #tpu.pipeline_mode<synchronous>, transform_indices = @transform_0, window_bounds = array<i64: 64, 16>}, {pipeline_mode = #tpu.pipeline_mode<synchronous>, transform_indices = @transform_1, window_bounds = array<i64: 16, 128>}, {pipeline_mode = #tpu.pipeline_mode<synchronous>, transform_indices = @transform_2, window_bounds = array<i64: 1, 128>}, {pipeline_mode = #tpu.pipeline_mode<synchronous>, transform_indices = @transform_3, window_bounds = array<i64: 64, 128>}]} {
    %c0 = arith.constant 0 : index
    %c0_0 = arith.constant 0 : index
    %0 = vector.load %arg1[%c0, %c0_0] : memref<64x16xf32, #tpu.memory_space<vmem>>, vector<64x16xf32>
    %c0_1 = arith.constant 0 : index
    %c0_2 = arith.constant 0 : index
    %1 = vector.load %arg2[%c0_1, %c0_2] : memref<16x128xf32, #tpu.memory_space<vmem>>, vector<16x128xf32>
    %cst = arith.constant dense<0.000000e+00> : vector<64x128xf32>
    %2 = tpu.matmul %0, %1, %cst {dimension_numbers = #tpu.dot_dimension_numbers<[1], [0], [0], [1], [0, 0, 1, 1], [], []>} : vector<64x16xf32>, vector<16x128xf32>, vector<64x128xf32> -> vector<64x128xf32>
    %c0_3 = arith.constant 0 : index
    %c0_4 = arith.constant 0 : index
    %3 = vector.load %arg3[%c0_3, %c0_4] : memref<1x128xf32, #tpu.memory_space<vmem>>, vector<1x128xf32>
    %4 = vector.broadcast %3 : vector<1x128xf32> to vector<64x128xf32>
    %5 = arith.addf %2, %4 : vector<64x128xf32>
    %c0_5 = arith.constant 0 : index
    %c0_6 = arith.constant 0 : index
    %6 = vector.load %arg4[%c0_5, %c0_6] : memref<64x128xf32, #tpu.memory_space<vmem>>, vector<64x128xf32>
    tpu.vector_store %arg4[%c0_5, %c0_6], %5 {strides = array<i32>} : memref<64x128xf32, #tpu.memory_space<vmem>>, vector<64x128xf32>,
    return
  }
  func.func @transform_0(%arg0: i32) -> (i32, i32) {
    %c0_i32 = arith.constant 0 : i32
    %c0_i32_0 = arith.constant 0 : i32
    %c0_i32_1 = arith.constant 0 : i32
    return %c0_i32, %c0_i32_0 : i32, i32
  }
  func.func @transform_1(%arg0: i32) -> (i32, i32) {
    %c0_i32 = arith.constant 0 : i32
    %c0_i32_0 = arith.constant 0 : i32
    %c0_i32_1 = arith.constant 0 : i32
    return %c0_i32, %c0_i32_0 : i32, i32
  }
  func.func @transform_2(%arg0: i32) -> (i32, i32) {
    %c0_i32 = arith.constant 0 : i32
    %c0_i32_0 = arith.constant 0 : i32
    %c0_i32_1 = arith.constant 0 : i32
    return %c0_i32, %c0_i32_0 : i32, i32
  }
  func.func @transform_3(%arg0: i32) -> (i32, i32) {
    %c0_i32 = arith.constant 0 : i32
    %c0_i32_0 = arith.constant 0 : i32
    %c0_i32_1 = arith.constant 0 : i32
    return %c0_i32, %c0_i32_0 : i32, i32
  }
}

</mosaic_0001>

<llo_original>
// kernel: tpu_custom_call.1
$region0: #{tpu_custom_call.1}
  #allocation0 [shape = 'u32[]', space=smem, size = 0x4, offset = 0x4, fixed_abs, tag = 'smem constant byte address 0x4 - core index']
  #allocation1 [shape = 'u32[72,128]{1,0:T(1,128)}', space=vmem, size = 0x9000, scoped, tag = 'internal scratch']
  %s0 = inlined_call_operand.vmem [shape: f32[64,16], index: 0, kind: input, shape index: {}]
  %s1 = inlined_call_operand.vmem [shape: f32[16,128], index: 1, kind: input, shape index: {}]
  %s2 = inlined_call_operand.vmem [shape: f32[1,128], index: 2, kind: input, shape index: {}]
  %s3 = inlined_call_operand.hbm [shape: f32[64,128], index: 3, kind: output, shape index: {}]
  %s4 = sld [smem:[#allocation0]]
  $region22: #{tpu_custom_call.1} parent=0
    _
  %s6 = ssub.s32 1, %s4
  %s7 = scalar_select 0, %s6, %s4
  $region1: #{tpu_custom_call.1} parent=0
    #allocation2 [shape = 'u8[32768]{0}', space=vmem, size = 0x8000, scoped, tag = 'output window, operand 0, single buffered']
    #allocation3 [shape = 's32[1]{0}', space=sflag, size = 0x4, scoped, tag = 'scoped memory for tpu_custom_call.1']
    %8 = vsyncpa [#allocation3], 0
    // Predicated region
    $region2: #{tpu_custom_call.1} parent=1 // pred_check
      _
    $region3: #{tpu_custom_call.1} parent=1 // pred_check_branch
      %10 = sbr.rel (0) target = $region5
    $region4: #{tpu_custom_call.1} parent=1 // pred_region
      _
    $region5: #{tpu_custom_call.1} parent=1 // pred_fallthru
      _
    // Predicated region
    $region6: #{tpu_custom_call.1} parent=1 // pred_check
      _
    $region7: #{tpu_custom_call.1} parent=1 // pred_check_branch
      %12 = sbr.rel (0) target = $region9
    $region8: #{tpu_custom_call.1} parent=1 // pred_region
      _
    $region9: #{tpu_custom_call.1} parent=1 // pred_fallthru
      _
    // Predicated region
    $region10: #{tpu_custom_call.1} parent=1 // pred_check
      _
    $region11: #{tpu_custom_call.1} parent=1 // pred_check_branch
      %14 = sbr.rel (0) target = $region13
    $region12: #{tpu_custom_call.1} parent=1 // pred_region
      _
    $region13: #{tpu_custom_call.1} parent=1 // pred_fallthru
      _
    %v15 = vld [vmem:[%s0] sm:$0xff]
    %v16 = vld [vmem:[%s0 + $0x8] sm:$0xff]
    %v17 = vld [vmem:[%s0 + $0x10] sm:$0xff]
    %v18 = vld [vmem:[%s0 + $0x18] sm:$0xff]
    %v19 = vld [vmem:[%s0 + $0x20] sm:$0xff]
    %v20 = vld [vmem:[%s0 + $0x28] sm:$0xff]
    %v21 = vld [vmem:[%s0 + $0x30] sm:$0xff]
    %v22 = vld [vmem:[%s0 + $0x38] sm:$0xff]
    %v23 = vld [vmem:[%s1] sm:$0xff]
    %v24 = vld [vmem:[%s1 + $0x8] sm:$0xff]
    %v25 = vld [vmem:[%s2] sm:$0x1]
    %v27 = vperm.slane %v25, 0
    %vm29 = vcmask 130048
    %v31 = vsel %vm29, %v15, 0
    %v34 = vsel %vm29, %v16, 0
    %v37 = vsel %vm29, %v17, 0
    %v40 = vsel %vm29, %v18, 0
    %v43 = vsel %vm29, %v19, 0
    %v46 = vsel %vm29, %v20, 0
    %v49 = vsel %vm29, %v21, 0
    %v52 = vsel %vm29, %v22, 0
    %54 = vmatpush.msra.mxu0 0.0
    %55 = vmatpush.msra.mxu0 0.0
    %56 = vmatpush.msra.mxu0 0.0
    %57 = vmatpush.msra.mxu0 0.0
    %58 = vmatpush.msra.mxu0 0.0
    %59 = vmatpush.msra.mxu0 0.0
    %60 = vmatpush.msra.mxu0 0.0
    %61 = vmatpush.msra.mxu0 0.0
    %62 = vmatpush.msra.mxu0 0.0
    %63 = vmatpush.msra.mxu0 0.0
    %64 = vmatpush.msra.mxu0 0.0
    %65 = vmatpush.msra.mxu0 0.0
    %66 = vmatpush.msra.mxu0 0.0
    %67 = vmatpush.msra.mxu0 0.0
    %68 = vmatpush.msra.mxu0 %v24
    %69 = vmatpush.msra.mxu0 %v23
    %70 = vmatmul.f32.gmra.mxu0 %v31
    %v71 = vpop.f32.mrf.mxu0
    %v72 = vadd.f32 %v27, %v71
    %73 = vmatmul.f32.gmra.mxu0 %v34
    %v74 = vpop.f32.mrf.mxu0
    %v75 = vadd.f32 %v27, %v74
    %76 = vmatmul.f32.gmra.mxu0 %v37
    %v77 = vpop.f32.mrf.mxu0
    %v78 = vadd.f32 %v27, %v77
    %79 = vmatmul.f32.gmra.mxu0 %v40
    %v80 = vpop.f32.mrf.mxu0
    %v81 = vadd.f32 %v27, %v80
    %82 = vmatmul.f32.gmra.mxu0 %v43
    %v83 = vpop.f32.mrf.mxu0
    %v84 = vadd.f32 %v27, %v83
    %85 = vmatmul.f32.gmra.mxu0 %v46
    %v86 = vpop.f32.mrf.mxu0
    %v87 = vadd.f32 %v27, %v86
    %88 = vmatmul.f32.gmra.mxu0 %v49
    %v89 = vpop.f32.mrf.mxu0
    %v90 = vadd.f32 %v27, %v89
    %91 = vmatmul.f32.gmra.mxu0 %v52
    %v92 = vpop.f32.mrf.mxu0
    %v93 = vadd.f32 %v27, %v92
    %94 = vdwg.mxu0
    %95 = vst [vmem:[#allocation2] sm:$0xff] %v72
    %96 = vst [vmem:[#allocation2 + $0x8] sm:$0xff] %v75
    %97 = vst [vmem:[#allocation2 + $0x10] sm:$0xff] %v78
    %98 = vst [vmem:[#allocation2 + $0x18] sm:$0xff] %v81
    %99 = vst [vmem:[#allocation2 + $0x20] sm:$0xff] %v84
    %100 = vst [vmem:[#allocation2 + $0x28] sm:$0xff] %v87
    %101 = vst [vmem:[#allocation2 + $0x30] sm:$0xff] %v90
    %102 = vst [vmem:[#allocation2 + $0x38] sm:$0xff] %v93
    // Predicated region
    $region14: #{tpu_custom_call.1} parent=1 // pred_check
      _
    $region15: #{tpu_custom_call.1} parent=1 // pred_check_branch
      %104 = sbr.rel (0) target = $region17
    $region16: #{tpu_custom_call.1} parent=1 // pred_region
      %106 = vsyncadd [#allocation3], 0
      %s107 = sshll.u32 [#allocation2], 4
      %s108 = int_to_ptr.vmem [resolvable:$true] %s107
      %s109 = sshll.u32 %s3, 4
      %s110 = int_to_ptr.hbm [resolvable:$true] %s109
      %115 = dma.vmem_to_hbm [thread:$0]  %s108, 1024, %s110, [#allocation3], 128, 128, 8
    $region17: #{tpu_custom_call.1} parent=1 // pred_fallthru
      _
    // Predicated region
    $region18: #{tpu_custom_call.1} parent=1 // pred_check
      _
    $region19: #{tpu_custom_call.1} parent=1 // pred_check_branch
      %117 = sbr.rel (0) target = $region21
    $region20: #{tpu_custom_call.1} parent=1 // pred_region
      %119 = dma.done [#allocation3], 1024
    $region21: #{tpu_custom_call.1} parent=1 // pred_fallthru
      _
    %120 = vsyncpa [#allocation3], 1

</llo_original>
